<compile_context>
chip_gen: v6e
topology: v6e:2x2x1
jax: 0.10.0
libtpu: 0.0.40
codegen_flags: <defaults>
</compile_context>

<pallas_src>
import functools

import jax
import jax.numpy as jnp
from jax import lax
from jax.experimental import pallas as pl
from jax.experimental.pallas import tpu as pltpu


def _round_up(a: int, b: int) -> int:
    return ((a + b - 1) // b) * b


def _linear_kernel_acc(x_ref, w_ref, b_ref, o_ref, acc_ref):
    """Multi-step K reduction: f32 accumulator, bias added on the last step."""
    @pl.when(pl.program_id(2) == 0)
    def _init():
        acc_ref[...] = jnp.zeros_like(acc_ref)

    # x: (tm, tk), w: (tn, tk) -> contract K of both (no transpose needed).
    acc_ref[...] += lax.dot_general(
        x_ref[...],
        w_ref[...],
        dimension_numbers=(((1,), (1,)), ((), ())),
        preferred_element_type=jnp.float32,
    )

    @pl.when(pl.program_id(2) == pl.num_programs(2) - 1)
    def _finalize():
        o_ref[...] = (acc_ref[...] + b_ref[...]).astype(o_ref.dtype)


def _linear_kernel_noacc(x_ref, w_ref, b_ref, o_ref):
    """Single K step: write matmul + bias straight to the output block."""
    o_ref[...] = (
        lax.dot_general(
            x_ref[...],
            w_ref[...],
            dimension_numbers=(((1,), (1,)), ((), ())),
            preferred_element_type=jnp.float32,
        )
        + b_ref[...]
    ).astype(o_ref.dtype)


@functools.partial(jax.jit, static_argnames=("tm", "tn", "tk"))
def pim_linear(x, weight, bias, *, tm=None, tn=None, tk=None):
    """y = x @ weight.T + bias  (PIMLinear.forward).

    x:      (M, in_features)
    weight: (out_features, in_features)   -- kept in native (N, K) layout
    bias:   (out_features,)
    """
    M, K = x.shape
    N, K2 = weight.shape
    assert K == K2, "in_features mismatch"
    assert bias.shape == (N,)

    out_dtype = x.dtype

    # --- Tile defaults: hardware aligned, VMEM-friendly on v5e/v6e/v7x. ---
    # Small M (inference-thin activations): don't tile M, just sublane-align it.
    tm = tm or min(_round_up(M, 8), 256)
    tn = tn or min(_round_up(N, 128), 512)
    tk = tk or min(_round_up(K, 128), 512)

    # --- Pad to tile multiples (zeros are harmless for matmul + bias). ---
    Mp, Np, Kp = _round_up(M, tm), _round_up(N, tn), _round_up(K, tk)
    if (Mp, Kp) != (M, K):
        x = jnp.pad(x, ((0, Mp - M), (0, Kp - K)))
    if (Np, Kp) != (N, K):
        weight = jnp.pad(weight, ((0, Np - N), (0, Kp - K)))
    b2 = bias.astype(jnp.float32)
    if Np != N:
        b2 = jnp.pad(b2, (0, Np - N))
    b2 = b2.reshape(1, Np)

    grid = (Mp // tm, Np // tn, Kp // tk)
    nk = grid[2]

    if nk == 1:
        kernel = _linear_kernel_noacc
        scratch_shapes = []
    else:
        kernel = _linear_kernel_acc
        scratch_shapes = [pltpu.VMEM((tm, tn), jnp.float32)]

    # --- VMEM budget: double-buffered inputs + acc + double-buffered output ---
    x_b = x.dtype.itemsize
    w_b = weight.dtype.itemsize
    o_b = jnp.dtype(out_dtype).itemsize
    vmem_need = (
        2 * (tm * tk * x_b + tn * tk * w_b + tn * 4)
        + tm * tn * 4
        + 2 * tm * tn * o_b
    )
    vmem_limit = int(min(max(2 * vmem_need, 32 * 1024 * 1024), 64 * 1024 * 1024))

    cost = pl.CostEstimate(
        flops=2 * Mp * Np * Kp,
        bytes_accessed=Mp * Kp * x_b + Np * Kp * w_b + Np * 4 + Mp * Np * o_b,
        transcendentals=0,
    )

    out = pl.pallas_call(
        kernel,
        out_shape=jax.ShapeDtypeStruct((Mp, Np), out_dtype),
        grid_spec=pltpu.PrefetchScalarGridSpec(
            num_scalar_prefetch=0,
            grid=grid,
            in_specs=[
                pl.BlockSpec((tm, tk), lambda i, j, k: (i, k)),  # x   (M, K)
                pl.BlockSpec((tn, tk), lambda i, j, k: (j, k)),  # W   (N, K) native
                pl.BlockSpec((1, tn), lambda i, j, k: (0, j)),   # bias (1, N) f32
            ],
            out_specs=pl.BlockSpec((tm, tn), lambda i, j, k: (i, j)),
            scratch_shapes=scratch_shapes,
        ),
        compiler_params=pltpu.CompilerParams(
            dimension_semantics=("parallel", "parallel", "arbitrary"),
            vmem_limit_bytes=vmem_limit,
        ),
        cost_estimate=cost,
    )(x, weight, b2)

    # Slice away padding.
    if (Mp, Np) != (M, N):
        out = out[:M, :N]
    return out


if __name__ == "__main__":
    # Small, module-consistent shapes: batch=8 rows, in_features=32, out_features=16.
    M, IN_FEATURES, OUT_FEATURES = 8, 32, 16

    key = jax.random.PRNGKey(0)
    kx, kw, kb = jax.random.split(key, 3)

    x = jax.random.normal(kx, (M, IN_FEATURES), dtype=jnp.float32)
    # Deterministic parameter init (synthetic; no checkpoint load).
    weight = jax.random.normal(kw, (OUT_FEATURES, IN_FEATURES), dtype=jnp.float32) * 0.1
    bias = jax.random.normal(kb, (OUT_FEATURES,), dtype=jnp.float32) * 0.1

    y = pim_linear(x, weight, bias)
    y = jax.block_until_ready(y)

    # Reference check against plain JAX (same math as PyTorch forward).
    y_ref = x @ weight.T + bias[None, :]
    assert y.shape == (M, OUT_FEATURES)
    assert jnp.allclose(y, y_ref, atol=1e-5, rtol=1e-5), "mismatch vs reference"

    # Also exercise a non-divisible, multi-K-tile shape to cover the
    # accumulator path + padding logic.
    M2, K2_, N2 = 130, 1000, 300
    k2x, k2w, k2b = jax.random.split(jax.random.PRNGKey(1), 3)
    x2 = jax.random.normal(k2x, (M2, K2_), dtype=jnp.float32)
    w2 = jax.random.normal(k2w, (N2, K2_), dtype=jnp.float32) * 0.05
    b2 = jax.random.normal(k2b, (N2,), dtype=jnp.float32) * 0.05
    y2 = jax.block_until_ready(pim_linear(x2, w2, b2))
    y2_ref = x2 @ w2.T + b2[None, :]
    assert jnp.allclose(y2, y2_ref, atol=1e-3, rtol=1e-3), "mismatch vs reference (large)"

    print("KERNEL_OK")
</pallas_src>

<mosaic_0001>
module attributes {stable_mosaic.version = 11 : i64} {
  func.func @_linear_kernel_noacc(%arg0: i32, %arg1: i32, %arg2: i32, %arg3: memref<8x128xf32, #tpu.memory_space<vmem>>, %arg4: memref<128x128xf32, #tpu.memory_space<vmem>>, %arg5: memref<1x128xf32, #tpu.memory_space<vmem>>, %arg6: memref<8x128xf32, #tpu.memory_space<vmem>>) attributes {dimension_semantics = [#tpu.dimension_semantics<parallel>, #tpu.dimension_semantics<parallel>, #tpu.dimension_semantics<arbitrary>], iteration_bounds = array<i64: 1, 1, 1>, scalar_prefetch = 0 : i64, scratch_operands = 0 : i64, tpu.core_type = #tpu.core_type<tc>, window_params = [{transform_indices = @transform_0, window_bounds = array<i64: 8, 128>}, {transform_indices = @transform_1, window_bounds = array<i64: 128, 128>}, {transform_indices = @transform_2, window_bounds = array<i64: 1, 128>}, {transform_indices = @transform_3, window_bounds = array<i64: 8, 128>}]} {
    %c0 = arith.constant 0 : index
    %c0_0 = arith.constant 0 : index
    %0 = vector.load %arg3[%c0, %c0_0] : memref<8x128xf32, #tpu.memory_space<vmem>>, vector<8x128xf32>
    %c0_1 = arith.constant 0 : index
    %c0_2 = arith.constant 0 : index
    %1 = vector.load %arg4[%c0_1, %c0_2] : memref<128x128xf32, #tpu.memory_space<vmem>>, vector<128x128xf32>
    %cst = arith.constant dense<0.000000e+00> : vector<8x128xf32>
    %2 = tpu.matmul %0, %1, %cst {dimension_numbers = #tpu.dot_dimension_numbers<[1], [1], [0], [0], [0, 0, 1, 0], [], []>} : vector<8x128xf32>, vector<128x128xf32>, vector<8x128xf32> -> vector<8x128xf32>
    %c0_3 = arith.constant 0 : index
    %c0_4 = arith.constant 0 : index
    %3 = vector.load %arg5[%c0_3, %c0_4] : memref<1x128xf32, #tpu.memory_space<vmem>>, vector<1x128xf32>
    %4 = vector.broadcast %3 : vector<1x128xf32> to vector<8x128xf32>
    %5 = arith.addf %2, %4 : vector<8x128xf32>
    %c0_5 = arith.constant 0 : index
    %c0_6 = arith.constant 0 : index
    %6 = vector.load %arg6[%c0_5, %c0_6] : memref<8x128xf32, #tpu.memory_space<vmem>>, vector<8x128xf32>
    tpu.vector_store %arg6[%c0_5, %c0_6], %5 {strides = array<i32>} : memref<8x128xf32, #tpu.memory_space<vmem>>, vector<8x128xf32>,
    return
  }
  func.func @transform_0(%arg0: i32, %arg1: i32, %arg2: i32) -> (i32, i32) {
    %c0_i32 = arith.constant 0 : i32
    return %arg0, %arg2 : i32, i32
  }
  func.func @transform_1(%arg0: i32, %arg1: i32, %arg2: i32) -> (i32, i32) {
    %c0_i32 = arith.constant 0 : i32
    return %arg1, %arg2 : i32, i32
  }
  func.func @transform_2(%arg0: i32, %arg1: i32, %arg2: i32) -> (i32, i32) {
    %c0_i32 = arith.constant 0 : i32
    %c0_i32_0 = arith.constant 0 : i32
    return %c0_i32, %arg1 : i32, i32
  }
  func.func @transform_3(%arg0: i32, %arg1: i32, %arg2: i32) -> (i32, i32) {
    %c0_i32 = arith.constant 0 : i32
    return %arg0, %arg1 : i32, i32
  }
}

</mosaic_0001>

<llo_original>
// kernel: pim_linear.1
$region0: #{pim_linear.1}
  #allocation0 [shape = 'u32[]', space=smem, size = 0x4, offset = 0x4, fixed_abs, tag = 'smem constant byte address 0x4 - core index']
  #allocation1 [shape = 'u32[144,128]{1,0:T(1,128)}', space=vmem, size = 0x12000, scoped, tag = 'internal scratch']
  %s0 = inlined_call_operand.vmem [shape: f32[8,128], index: 0, kind: input, shape index: {}]
  %s1 = inlined_call_operand.vmem [shape: f32[128,128], index: 1, kind: input, shape index: {}]
  %s2 = inlined_call_operand.vmem [shape: f32[1,128], index: 2, kind: input, shape index: {}]
  %s3 = inlined_call_operand.hbm [shape: f32[8,128], index: 3, kind: output, shape index: {}]
  %s4 = sld [smem:[#allocation0]]
  $region22: #{pim_linear.1} parent=0
    _
  %s6 = ssub.s32 1, %s4
  %s7 = scalar_select 0, %s6, %s4
  $region1: #{pim_linear.1} parent=0
    #allocation2 [shape = 'u8[4096]{0}', space=vmem, size = 0x1000, scoped, tag = 'output window, operand 0, single buffered']
    #allocation3 [shape = 's32[1]{0}', space=sflag, size = 0x4, scoped, tag = 'scoped memory for pim_linear.1']
    %8 = vsyncpa [#allocation3], 0
    // Predicated region
    $region2: #{pim_linear.1} parent=1 // pred_check
      _
    $region3: #{pim_linear.1} parent=1 // pred_check_branch
      %10 = sbr.rel (0) target = $region5
    $region4: #{pim_linear.1} parent=1 // pred_region
      _
    $region5: #{pim_linear.1} parent=1 // pred_fallthru
      _
    // Predicated region
    $region6: #{pim_linear.1} parent=1 // pred_check
      _
    $region7: #{pim_linear.1} parent=1 // pred_check_branch
      %12 = sbr.rel (0) target = $region9
    $region8: #{pim_linear.1} parent=1 // pred_region
      _
    $region9: #{pim_linear.1} parent=1 // pred_fallthru
      _
    // Predicated region
    $region10: #{pim_linear.1} parent=1 // pred_check
      _
    $region11: #{pim_linear.1} parent=1 // pred_check_branch
      %14 = sbr.rel (0) target = $region13
    $region12: #{pim_linear.1} parent=1 // pred_region
      _
    $region13: #{pim_linear.1} parent=1 // pred_fallthru
      _
    %v15 = vld [vmem:[%s0] sm:$0xff]
    %v16 = vld [vmem:[%s1] sm:$0xff]
    %v17 = vld [vmem:[%s1 + $0x8] sm:$0xff]
    %v18 = vld [vmem:[%s1 + $0x10] sm:$0xff]
    %v19 = vld [vmem:[%s1 + $0x18] sm:$0xff]
    %v20 = vld [vmem:[%s1 + $0x20] sm:$0xff]
    %v21 = vld [vmem:[%s1 + $0x28] sm:$0xff]
    %v22 = vld [vmem:[%s1 + $0x30] sm:$0xff]
    %v23 = vld [vmem:[%s1 + $0x38] sm:$0xff]
    %v24 = vld [vmem:[%s1 + $0x40] sm:$0xff]
    %v25 = vld [vmem:[%s1 + $0x48] sm:$0xff]
    %v26 = vld [vmem:[%s1 + $0x50] sm:$0xff]
    %v27 = vld [vmem:[%s1 + $0x58] sm:$0xff]
    %v28 = vld [vmem:[%s1 + $0x60] sm:$0xff]
    %v29 = vld [vmem:[%s1 + $0x68] sm:$0xff]
    %v30 = vld [vmem:[%s1 + $0x70] sm:$0xff]
    %v31 = vld [vmem:[%s1 + $0x78] sm:$0xff]
    %v32 = vld [vmem:[%s2] sm:$0x1]
    %v34 = vlaneseq
    %v35 = vshrl.u32 %v34, 7
    %v36 = vsub.s32 0, %v35
    %v37 = vrot.slane %v32, %v36
    %39 = vmatprep.subr.mxu0 0.0
    %40 = vmatpush1.xpose.msra.mxu0 %v31
    %41 = vmatprep.subr.mxu0 0.0
    %42 = vmatpush1.xpose.msra.mxu0 %v30
    %43 = vmatprep.subr.mxu0 0.0
    %44 = vmatpush1.xpose.msra.mxu0 %v29
    %45 = vmatprep.subr.mxu0 0.0
    %46 = vmatpush1.xpose.msra.mxu0 %v28
    %47 = vmatprep.subr.mxu0 0.0
    %48 = vmatpush1.xpose.msra.mxu0 %v27
    %49 = vmatprep.subr.mxu0 0.0
    %50 = vmatpush1.xpose.msra.mxu0 %v26
    %51 = vmatprep.subr.mxu0 0.0
    %52 = vmatpush1.xpose.msra.mxu0 %v25
    %53 = vmatprep.subr.mxu0 0.0
    %54 = vmatpush1.xpose.msra.mxu0 %v24
    %55 = vmatprep.subr.mxu0 0.0
    %56 = vmatpush1.xpose.msra.mxu0 %v23
    %57 = vmatprep.subr.mxu0 0.0
    %58 = vmatpush1.xpose.msra.mxu0 %v22
    %59 = vmatprep.subr.mxu0 0.0
    %60 = vmatpush1.xpose.msra.mxu0 %v21
    %61 = vmatprep.subr.mxu0 0.0
    %62 = vmatpush1.xpose.msra.mxu0 %v20
    %63 = vmatprep.subr.mxu0 0.0
    %64 = vmatpush1.xpose.msra.mxu0 %v19
    %65 = vmatprep.subr.mxu0 0.0
    %66 = vmatpush1.xpose.msra.mxu0 %v18
    %67 = vmatprep.subr.mxu0 0.0
    %68 = vmatpush1.xpose.msra.mxu0 %v17
    %69 = vmatprep.subr.mxu0 0.0
    %70 = vmatpush1.xpose.msra.mxu0 %v16
    %71 = vmatprep.subr.mxu0 0.0
    %72 = vmatpush2.xpose.msra.mxu0 0.0
    %73 = vmatprep.subr.mxu0 0.0
    %74 = vmatpush2.xpose.msra.mxu0 0.0
    %75 = vmatprep.subr.mxu0 0.0
    %76 = vmatpush2.xpose.msra.mxu0 0.0
    %77 = vmatprep.subr.mxu0 0.0
    %78 = vmatpush2.xpose.msra.mxu0 0.0
    %79 = vmatprep.subr.mxu0 0.0
    %80 = vmatpush2.xpose.msra.mxu0 0.0
    %81 = vmatprep.subr.mxu0 0.0
    %82 = vmatpush2.xpose.msra.mxu0 0.0
    %83 = vmatprep.subr.mxu0 0.0
    %84 = vmatpush2.xpose.msra.mxu0 0.0
    %85 = vmatprep.subr.mxu0 0.0
    %86 = vmatpush2.xpose.msra.mxu0 0.0
    %87 = vmatprep.subr.mxu0 0.0
    %88 = vmatpush2.xpose.msra.mxu0 0.0
    %89 = vmatprep.subr.mxu0 0.0
    %90 = vmatpush2.xpose.msra.mxu0 0.0
    %91 = vmatprep.subr.mxu0 0.0
    %92 = vmatpush2.xpose.msra.mxu0 0.0
    %93 = vmatprep.subr.mxu0 0.0
    %94 = vmatpush2.xpose.msra.mxu0 0.0
    %95 = vmatprep.subr.mxu0 0.0
    %96 = vmatpush2.xpose.msra.mxu0 0.0
    %97 = vmatprep.subr.mxu0 0.0
    %98 = vmatpush2.xpose.msra.mxu0 0.0
    %99 = vmatprep.subr.mxu0 0.0
    %100 = vmatpush2.xpose.msra.mxu0 0.0
    %101 = vmatprep.subr.mxu0 0.0
    %102 = vmatpush2.xpose.msra.mxu0 0.0
    %103 = vmatprep.mubr.f32.mxu0 0.0
    %104 = vmatmul.mubr.f32.gmra.mxu0 %v15
    %v105 = vpop.f32.mrf.mxu0
    %v106 = vadd.f32 %v37, %v105
    %v107 = vpop.f32.mrf.mxu0
    %108 = vdwg.mxu0
    %109 = vst [vmem:[#allocation2] sm:$0xff] %v106
    // Predicated region
    $region14: #{pim_linear.1} parent=1 // pred_check
      _
    $region15: #{pim_linear.1} parent=1 // pred_check_branch
      %111 = sbr.rel (0) target = $region17
    $region16: #{pim_linear.1} parent=1 // pred_region
      %s113 = ssub.s32 128, 128
      %114 = vsyncadd [#allocation3], %s113
      %s116 = sshll.u32 [#allocation2], 4
      %s117 = int_to_ptr.vmem [resolvable:$true] %s116
      %119 = dma.vmem_to_hbm [thread:$0]  %s117, 128, %s3, [#allocation3]
    $region17: #{pim_linear.1} parent=1 // pred_fallthru
      _
    // Predicated region
    $region18: #{pim_linear.1} parent=1 // pred_check
      _
    $region19: #{pim_linear.1} parent=1 // pred_check_branch
      %121 = sbr.rel (0) target = $region21
    $region20: #{pim_linear.1} parent=1 // pred_region
      %122 = dma.done [#allocation3], 128
    $region21: #{pim_linear.1} parent=1 // pred_fallthru
      _
    %123 = vsyncpa [#allocation3], 1

</llo_original>
